<compile_context>
chip_gen: v5e
topology: v5e:2x2
jax: 0.10.0
libtpu: 0.0.40
codegen_flags: <defaults>
</compile_context>

<pallas_src>
import math

import jax
import jax.numpy as jnp
from jax.experimental import pallas as pl
from jax.experimental.pallas import tpu as pltpu

LATENT_DIM = 288          # backbone output size (1152 -> 288)
HIDDEN_DIM = 256
ACTION_SPACE = 12
PADDED_OUT = 128          # lane-dense padded output width (>= ACTION_SPACE)
TILE_B_DEFAULT = 256      # batch tile (multiple of 16 for bf16 sublane packing)


def _round_up(x, m):
    return ((x + m - 1) // m) * m


def _xavier_uniform(key, fan_in, fan_out, dtype=jnp.float32):
    """Matches nn.init.xavier_uniform_ for a Linear weight; returned as [in, out]."""
    bound = math.sqrt(6.0 / (fan_in + fan_out))
    # PyTorch weight is [out, in]; sample that shape then transpose so the kernel
    # can do x @ W directly.
    w = jax.random.uniform(key, (fan_out, fan_in), dtype=dtype,
                           minval=-bound, maxval=bound)
    return jnp.transpose(w)  # [in, out]


def init_params(key):
    k1, k2 = jax.random.split(key)
    w1 = _xavier_uniform(k1, 2 * LATENT_DIM, HIDDEN_DIM)       # [576, 256]
    b1 = jnp.zeros((1, HIDDEN_DIM), jnp.float32)               # [1, 256]
    w2 = _xavier_uniform(k2, HIDDEN_DIM, ACTION_SPACE)         # [256, 12]
    b2 = jnp.zeros((1, ACTION_SPACE), jnp.float32)             # [1, 12]
    return w1, b1, w2, b2


def _fc_kernel(ls_ref, lns_ref, w1a_ref, w1b_ref, b1_ref, w2_ref, b2_ref, o_ref):
    # ls/lns: [tb, 288] bf16, w1a/w1b: [288, 256] bf16, b1: [1, 256] f32,
    # w2: [256, 128] bf16 (zero-padded), b2: [1, 128] f32, o: [tb, 128] f32.
    h = jnp.dot(ls_ref[...], w1a_ref[...], preferred_element_type=jnp.float32)
    h = h + jnp.dot(lns_ref[...], w1b_ref[...], preferred_element_type=jnp.float32)
    h = h + b1_ref[...]
    h = jnp.maximum(h, 0.0)                                    # ReLU (f32)
    o = jnp.dot(h.astype(w2_ref.dtype), w2_ref[...],
                preferred_element_type=jnp.float32) + b2_ref[...]
    o_ref[...] = o.astype(o_ref.dtype)


def reverse_dynamics_forward(latent_state, latent_next_state, params,
                             tile_b=TILE_B_DEFAULT,
                             compute_dtype=jnp.bfloat16):
    """Pallas implementation of Reverse_Dynamics_Module.forward (concat fused)."""
    w1, b1, w2, b2 = params
    B = latent_state.shape[0]

    # --- trace-time parameter prep (free: folded by XLA) -----------------------
    w1a = w1[:LATENT_DIM, :].astype(compute_dtype)             # [288, 256]
    w1b = w1[LATENT_DIM:, :].astype(compute_dtype)             # [288, 256]
    w2p = jnp.zeros((HIDDEN_DIM, PADDED_OUT), compute_dtype)
    w2p = w2p.at[:, :ACTION_SPACE].set(w2.astype(compute_dtype))  # [256, 128]
    b1f = b1.astype(jnp.float32)                               # [1, 256]
    b2p = jnp.zeros((1, PADDED_OUT), jnp.float32)
    b2p = b2p.at[:, :ACTION_SPACE].set(b2.astype(jnp.float32)) # [1, 128]

    # --- batch tiling / padding ------------------------------------------------
    tb = min(tile_b, _round_up(B, 16))          # multiple of 16 (bf16 packing)
    Bp = _round_up(B, tb)
    pad = Bp - B
    ls = latent_state.astype(compute_dtype)
    lns = latent_next_state.astype(compute_dtype)
    if pad:
        ls = jnp.pad(ls, ((0, pad), (0, 0)))
        lns = jnp.pad(lns, ((0, pad), (0, 0)))
    grid = (Bp // tb,)

    itemsize_c = jnp.dtype(compute_dtype).itemsize
    cost = pl.CostEstimate(
        flops=2 * Bp * (2 * LATENT_DIM * HIDDEN_DIM + HIDDEN_DIM * PADDED_OUT),
        transcendentals=0,
        bytes_accessed=(2 * Bp * LATENT_DIM * itemsize_c            # activations in
                        + (2 * LATENT_DIM * HIDDEN_DIM
                           + HIDDEN_DIM * PADDED_OUT) * itemsize_c  # weights
                        + (HIDDEN_DIM + PADDED_OUT) * 4             # biases
                        + Bp * PADDED_OUT * 4),                     # output
    )

    out = pl.pallas_call(
        _fc_kernel,
        out_shape=jax.ShapeDtypeStruct((Bp, PADDED_OUT), jnp.float32),
        grid=grid,
        in_specs=[
            pl.BlockSpec((tb, LATENT_DIM), lambda i: (i, 0)),          # latent_state tile
            pl.BlockSpec((tb, LATENT_DIM), lambda i: (i, 0)),          # latent_next tile
            pl.BlockSpec((LATENT_DIM, HIDDEN_DIM), lambda i: (0, 0)),  # w1a (resident)
            pl.BlockSpec((LATENT_DIM, HIDDEN_DIM), lambda i: (0, 0)),  # w1b (resident)
            pl.BlockSpec((1, HIDDEN_DIM), lambda i: (0, 0)),           # b1  (resident)
            pl.BlockSpec((HIDDEN_DIM, PADDED_OUT), lambda i: (0, 0)),  # w2  (resident)
            pl.BlockSpec((1, PADDED_OUT), lambda i: (0, 0)),           # b2  (resident)
        ],
        out_specs=pl.BlockSpec((tb, PADDED_OUT), lambda i: (i, 0)),
        compiler_params=pltpu.CompilerParams(
            dimension_semantics=("parallel",)),                       # v7x: 2 TCs
        cost_estimate=cost,
    )(ls, lns, w1a, w1b, b1f, w2p, b2p)

    return out[:B, :ACTION_SPACE]


def _reference_forward(latent_state, latent_next_state, params,
                       compute_dtype=jnp.bfloat16):
    """Pure-JAX reference matching the kernel's bf16-operand / f32-accumulate math."""
    w1, b1, w2, b2 = params
    cdt = compute_dtype
    w1a = w1[:LATENT_DIM, :].astype(cdt)
    w1b = w1[LATENT_DIM:, :].astype(cdt)
    h = (jnp.dot(latent_state.astype(cdt), w1a, preferred_element_type=jnp.float32)
         + jnp.dot(latent_next_state.astype(cdt), w1b, preferred_element_type=jnp.float32)
         + b1.astype(jnp.float32))
    h = jnp.maximum(h, 0.0)
    o = jnp.dot(h.astype(cdt), w2.astype(cdt),
                preferred_element_type=jnp.float32) + b2.astype(jnp.float32)
    return o


if __name__ == "__main__":
    key = jax.random.PRNGKey(0)
    kp, ks, kn = jax.random.split(key, 3)

    params = init_params(kp)

    B = 8  # small test batch (gets padded to the 16-row bf16 tile internally)
    latent_state = jax.random.normal(ks, (B, LATENT_DIM), jnp.float32)
    latent_next_state = jax.random.normal(kn, (B, LATENT_DIM), jnp.float32)

    out = reverse_dynamics_forward(latent_state, latent_next_state, params)
    out = jax.block_until_ready(out)

    ref = _reference_forward(latent_state, latent_next_state, params)
    assert out.shape == (B, ACTION_SPACE)
    assert jnp.allclose(out, ref, atol=1e-3, rtol=1e-3)

    # TODO(synk): backbone conv stack is only used by get_latent_state(), not
    # forward(); it is intentionally not ported here.
    print("KERNEL_OK")
</pallas_src>

<mosaic_0001>
module attributes {stable_mosaic.version = 11 : i64} {
  func.func @_fc_kernel(%arg0: i32, %arg1: memref<16x288xbf16, #tpu.memory_space<vmem>>, %arg2: memref<16x288xbf16, #tpu.memory_space<vmem>>, %arg3: memref<288x256xbf16, #tpu.memory_space<vmem>>, %arg4: memref<288x256xbf16, #tpu.memory_space<vmem>>, %arg5: memref<1x256xf32, #tpu.memory_space<vmem>>, %arg6: memref<256x128xbf16, #tpu.memory_space<vmem>>, %arg7: memref<1x128xf32, #tpu.memory_space<vmem>>, %arg8: memref<16x128xf32, #tpu.memory_space<vmem>>) attributes {dimension_semantics = [#tpu.dimension_semantics<parallel>], iteration_bounds = array<i64: 1>, scalar_prefetch = 0 : i64, scratch_operands = 0 : i64, tpu.core_type = #tpu.core_type<tc>, window_params = [{transform_indices = @transform_0, window_bounds = array<i64: 16, 288>}, {transform_indices = @transform_1, window_bounds = array<i64: 16, 288>}, {pipeline_mode = #tpu.pipeline_mode<synchronous>, transform_indices = @transform_2, window_bounds = array<i64: 288, 256>}, {pipeline_mode = #tpu.pipeline_mode<synchronous>, transform_indices = @transform_3, window_bounds = array<i64: 288, 256>}, {pipeline_mode = #tpu.pipeline_mode<synchronous>, transform_indices = @transform_4, window_bounds = array<i64: 1, 256>}, {pipeline_mode = #tpu.pipeline_mode<synchronous>, transform_indices = @transform_5, window_bounds = array<i64: 256, 128>}, {pipeline_mode = #tpu.pipeline_mode<synchronous>, transform_indices = @transform_6, window_bounds = array<i64: 1, 128>}, {transform_indices = @transform_7, window_bounds = array<i64: 16, 128>}]} {
    %c0 = arith.constant 0 : index
    %c0_0 = arith.constant 0 : index
    %0 = vector.load %arg1[%c0, %c0_0] : memref<16x288xbf16, #tpu.memory_space<vmem>>, vector<16x288xbf16>
    %c0_1 = arith.constant 0 : index
    %c0_2 = arith.constant 0 : index
    %1 = vector.load %arg3[%c0_1, %c0_2] : memref<288x256xbf16, #tpu.memory_space<vmem>>, vector<288x256xbf16>
    %cst = arith.constant dense<0.000000e+00> : vector<16x256xf32>
    %2 = tpu.matmul %0, %1, %cst {dimension_numbers = #tpu.dot_dimension_numbers<[1], [0], [0], [1], [0, 0, 1, 1], [], []>} : vector<16x288xbf16>, vector<288x256xbf16>, vector<16x256xf32> -> vector<16x256xf32>
    %c0_3 = arith.constant 0 : index
    %c0_4 = arith.constant 0 : index
    %3 = vector.load %arg2[%c0_3, %c0_4] : memref<16x288xbf16, #tpu.memory_space<vmem>>, vector<16x288xbf16>
    %c0_5 = arith.constant 0 : index
    %c0_6 = arith.constant 0 : index
    %4 = vector.load %arg4[%c0_5, %c0_6] : memref<288x256xbf16, #tpu.memory_space<vmem>>, vector<288x256xbf16>
    %cst_7 = arith.constant dense<0.000000e+00> : vector<16x256xf32>
    %5 = tpu.matmul %3, %4, %cst_7 {dimension_numbers = #tpu.dot_dimension_numbers<[1], [0], [0], [1], [0, 0, 1, 1], [], []>} : vector<16x288xbf16>, vector<288x256xbf16>, vector<16x256xf32> -> vector<16x256xf32>
    %6 = arith.addf %2, %5 : vector<16x256xf32>
    %c0_8 = arith.constant 0 : index
    %c0_9 = arith.constant 0 : index
    %7 = vector.load %arg5[%c0_8, %c0_9] : memref<1x256xf32, #tpu.memory_space<vmem>>, vector<1x256xf32>
    %8 = vector.broadcast %7 : vector<1x256xf32> to vector<16x256xf32>
    %9 = arith.addf %6, %8 : vector<16x256xf32>
    %cst_10 = arith.constant 0.000000e+00 : f32
    %10 = vector.broadcast %cst_10 : f32 to vector<16x256xf32>
    %11 = arith.maximumf %9, %10 : vector<16x256xf32>
    %12 = arith.truncf %11 : vector<16x256xf32> to vector<16x256xbf16>
    %c0_11 = arith.constant 0 : index
    %c0_12 = arith.constant 0 : index
    %13 = vector.load %arg6[%c0_11, %c0_12] : memref<256x128xbf16, #tpu.memory_space<vmem>>, vector<256x128xbf16>
    %cst_13 = arith.constant dense<0.000000e+00> : vector<16x128xf32>
    %14 = tpu.matmul %12, %13, %cst_13 {dimension_numbers = #tpu.dot_dimension_numbers<[1], [0], [0], [1], [0, 0, 1, 1], [], []>} : vector<16x256xbf16>, vector<256x128xbf16>, vector<16x128xf32> -> vector<16x128xf32>
    %c0_14 = arith.constant 0 : index
    %c0_15 = arith.constant 0 : index
    %15 = vector.load %arg7[%c0_14, %c0_15] : memref<1x128xf32, #tpu.memory_space<vmem>>, vector<1x128xf32>
    %16 = vector.broadcast %15 : vector<1x128xf32> to vector<16x128xf32>
    %17 = arith.addf %14, %16 : vector<16x128xf32>
    %c0_16 = arith.constant 0 : index
    %c0_17 = arith.constant 0 : index
    %18 = vector.load %arg8[%c0_16, %c0_17] : memref<16x128xf32, #tpu.memory_space<vmem>>, vector<16x128xf32>
    tpu.vector_store %arg8[%c0_16, %c0_17], %17 {strides = array<i32>} : memref<16x128xf32, #tpu.memory_space<vmem>>, vector<16x128xf32>,
    return
  }
  func.func @transform_0(%arg0: i32) -> (i32, i32) {
    %c0_i32 = arith.constant 0 : i32
    %c0_i32_0 = arith.constant 0 : i32
    return %arg0, %c0_i32 : i32, i32
  }
  func.func @transform_1(%arg0: i32) -> (i32, i32) {
    %c0_i32 = arith.constant 0 : i32
    %c0_i32_0 = arith.constant 0 : i32
    return %arg0, %c0_i32 : i32, i32
  }
  func.func @transform_2(%arg0: i32) -> (i32, i32) {
    %c0_i32 = arith.constant 0 : i32
    %c0_i32_0 = arith.constant 0 : i32
    %c0_i32_1 = arith.constant 0 : i32
    return %c0_i32, %c0_i32_0 : i32, i32
  }
  func.func @transform_3(%arg0: i32) -> (i32, i32) {
    %c0_i32 = arith.constant 0 : i32
    %c0_i32_0 = arith.constant 0 : i32
    %c0_i32_1 = arith.constant 0 : i32
    return %c0_i32, %c0_i32_0 : i32, i32
  }
  func.func @transform_4(%arg0: i32) -> (i32, i32) {
    %c0_i32 = arith.constant 0 : i32
    %c0_i32_0 = arith.constant 0 : i32
    %c0_i32_1 = arith.constant 0 : i32
    return %c0_i32, %c0_i32_0 : i32, i32
  }
  func.func @transform_5(%arg0: i32) -> (i32, i32) {
    %c0_i32 = arith.constant 0 : i32
    %c0_i32_0 = arith.constant 0 : i32
    %c0_i32_1 = arith.constant 0 : i32
    return %c0_i32, %c0_i32_0 : i32, i32
  }
  func.func @transform_6(%arg0: i32) -> (i32, i32) {
    %c0_i32 = arith.constant 0 : i32
    %c0_i32_0 = arith.constant 0 : i32
    %c0_i32_1 = arith.constant 0 : i32
    return %c0_i32, %c0_i32_0 : i32, i32
  }
  func.func @transform_7(%arg0: i32) -> (i32, i32) {
    %c0_i32 = arith.constant 0 : i32
    %c0_i32_0 = arith.constant 0 : i32
    return %arg0, %c0_i32 : i32, i32
  }
}

</mosaic_0001>

<llo_original>
// kernel: tpu_custom_call.1
$region0: #{tpu_custom_call.1}
  #allocation0 [shape = 'u32[]', space=smem, size = 0x4, offset = 0x4, fixed_abs, tag = 'smem constant byte address 0x4 - core index']
  #allocation1 [shape = 'u32[72,128]{1,0:T(1,128)}', space=vmem, size = 0x9000, scoped, tag = 'internal scratch']
  %s0 = inlined_call_operand.hbm [shape: bf16[16,288], index: 0, kind: input, shape index: {}]
  %s1 = inlined_call_operand.hbm [shape: bf16[16,288], index: 1, kind: input, shape index: {}]
  %s2 = inlined_call_operand.hbm [shape: bf16[288,256], index: 2, kind: input, shape index: {}]
  %s3 = inlined_call_operand.hbm [shape: bf16[288,256], index: 3, kind: input, shape index: {}]
  %s4 = inlined_call_operand.vmem [shape: f32[1,256], index: 4, kind: input, shape index: {}]
  %s5 = inlined_call_operand.hbm [shape: bf16[256,128], index: 5, kind: input, shape index: {}]
  %s6 = inlined_call_operand.vmem [shape: f32[1,128], index: 6, kind: input, shape index: {}]
  %s7 = inlined_call_operand.hbm [shape: f32[16,128], index: 7, kind: output, shape index: {}]
  %s8 = sld [smem:[#allocation0]]
  $region58: #{tpu_custom_call.1} parent=0
    _
  %s10 = ssub.s32 1, %s8
  %s11 = scalar_select 0, %s10, %s8
  $region1: #{tpu_custom_call.1} parent=0
    #allocation2 [shape = 'u8[12288]{0}', space=vmem, size = 0x3000, scoped, tag = 'input window, operand 0, single buffered']
    #allocation3 [shape = 's32[1]{0}', space=sflag, size = 0x4, scoped, tag = 'scoped memory for tpu_custom_call.1']
    #allocation4 [shape = 's32[1]{0}', space=sflag, size = 0x4, scoped, tag = 'scoped memory for tpu_custom_call.1']
    #allocation5 [shape = 'u8[12288]{0}', space=vmem, size = 0x3000, scoped, tag = 'input window, operand 1, single buffered']
    #allocation6 [shape = 's32[1]{0}', space=sflag, size = 0x4, scoped, tag = 'scoped memory for tpu_custom_call.1']
    #allocation7 [shape = 'u8[147456]{0}', space=vmem, size = 0x24000, scoped, tag = 'input window, operand 2, single buffered']
    #allocation8 [shape = 'u8[147456]{0}', space=vmem, size = 0x24000, scoped, tag = 'input window, operand 3, single buffered']
    #allocation9 [shape = 's32[1]{0}', space=sflag, size = 0x4, scoped, tag = 'scoped memory for tpu_custom_call.1']
    #allocation10 [shape = 'u8[65536]{0}', space=vmem, size = 0x10000, scoped, tag = 'input window, operand 5, single buffered']
    #allocation11 [shape = 'u8[8192]{0}', space=vmem, size = 0x2000, scoped, tag = 'output window, operand 0, single buffered']
    %12 = vsyncpa [#allocation3], 0
    %13 = vsyncpa [#allocation6], 0
    %14 = vsyncpa [#allocation9], 0
    %15 = vsyncpa [#allocation4], 0
    // Predicated region
    $region2: #{tpu_custom_call.1} parent=1 // pred_check
      _
    $region3: #{tpu_custom_call.1} parent=1 // pred_check_branch
      %17 = sbr.rel (0) target = $region5
    $region4: #{tpu_custom_call.1} parent=1 // pred_region
      %19 = vsyncadd [#allocation3], 0
      %s20 = sshll.u32 %s0, 4
      %s21 = int_to_ptr.hbm [resolvable:$true] %s20
      %s22 = sshll.u32 [#allocation2], 4
      %s23 = int_to_ptr.vmem [resolvable:$true] %s22
      %28 = dma.hbm_to_vmem [thread:$0]  %s21, 384, %s23, [#allocation3], 192, 192, 12
    $region5: #{tpu_custom_call.1} parent=1 // pred_fallthru
      _
    // Predicated region
    $region6: #{tpu_custom_call.1} parent=1 // pred_check
      _
    $region7: #{tpu_custom_call.1} parent=1 // pred_check_branch
      %30 = sbr.rel (0) target = $region9
    $region8: #{tpu_custom_call.1} parent=1 // pred_region
      %32 = vsyncadd [#allocation6], 0
      %s33 = sshll.u32 %s1, 4
      %s34 = int_to_ptr.hbm [resolvable:$true] %s33
      %s35 = sshll.u32 [#allocation5], 4
      %s36 = int_to_ptr.vmem [resolvable:$true] %s35
      %41 = dma.hbm_to_vmem [thread:$0]  %s34, 384, %s36, [#allocation6], 192, 192, 12
    $region9: #{tpu_custom_call.1} parent=1 // pred_fallthru
      _
    // Predicated region
    $region10: #{tpu_custom_call.1} parent=1 // pred_check
      _
    $region11: #{tpu_custom_call.1} parent=1 // pred_check_branch
      %43 = sbr.rel (0) target = $region13
    $region12: #{tpu_custom_call.1} parent=1 // pred_region
      %45 = vsyncadd [#allocation6], 0
      %s46 = sshll.u32 %s2, 4
      %s47 = int_to_ptr.hbm [resolvable:$true] %s46
      %s48 = sshll.u32 [#allocation7], 4
      %s49 = int_to_ptr.vmem [resolvable:$true] %s48
      %54 = dma.hbm_to_vmem [thread:$0]  %s47, 4608, %s49, [#allocation6], 128, 128, 8
    $region13: #{tpu_custom_call.1} parent=1 // pred_fallthru
      _
    // Predicated region
    $region14: #{tpu_custom_call.1} parent=1 // pred_check
      _
    $region15: #{tpu_custom_call.1} parent=1 // pred_check_branch
      %56 = sbr.rel (0) target = $region17
    $region16: #{tpu_custom_call.1} parent=1 // pred_region
      %58 = vsyncadd [#allocation9], 0
      %s59 = sshll.u32 %s3, 4
      %s60 = int_to_ptr.hbm [resolvable:$true] %s59
      %s61 = sshll.u32 [#allocation8], 4
      %s62 = int_to_ptr.vmem [resolvable:$true] %s61
      %67 = dma.hbm_to_vmem [thread:$0]  %s60, 4608, %s62, [#allocation9], 128, 128, 8
    $region17: #{tpu_custom_call.1} parent=1 // pred_fallthru
      _
    // Predicated region
    $region18: #{tpu_custom_call.1} parent=1 // pred_check
      _
    $region19: #{tpu_custom_call.1} parent=1 // pred_check_branch
      %69 = sbr.rel (0) target = $region21
    $region20: #{tpu_custom_call.1} parent=1 // pred_region
      _
    $region21: #{tpu_custom_call.1} parent=1 // pred_fallthru
      _
    // Predicated region
    $region22: #{tpu_custom_call.1} parent=1 // pred_check
      _
    $region23: #{tpu_custom_call.1} parent=1 // pred_check_branch
      %71 = sbr.rel (0) target = $region25
    $region24: #{tpu_custom_call.1} parent=1 // pred_region
      %73 = vsyncadd [#allocation9], 0
      %s74 = sshll.u32 %s5, 4
      %s75 = int_to_ptr.hbm [resolvable:$true] %s74
      %s76 = sshll.u32 [#allocation10], 4
      %s77 = int_to_ptr.vmem [resolvable:$true] %s76
      %82 = dma.hbm_to_vmem [thread:$0]  %s75, 2048, %s77, [#allocation9], 64, 64, 4
    $region25: #{tpu_custom_call.1} parent=1 // pred_fallthru
      _
    // Predicated region
    $region26: #{tpu_custom_call.1} parent=1 // pred_check
      _
    $region27: #{tpu_custom_call.1} parent=1 // pred_check_branch
      %84 = sbr.rel (0) target = $region29
    $region28: #{tpu_custom_call.1} parent=1 // pred_region
      _
    $region29: #{tpu_custom_call.1} parent=1 // pred_fallthru
      _
    // Predicated region
    $region30: #{tpu_custom_call.1} parent=1 // pred_check
      _
    $region31: #{tpu_custom_call.1} parent=1 // pred_check_branch
      %86 = sbr.rel (0) target = $region33
    $region32: #{tpu_custom_call.1} parent=1 // pred_region
      %88 = dma.done [#allocation3], 384
    $region33: #{tpu_custom_call.1} parent=1 // pred_fallthru
      _
    // Predicated region
    $region34: #{tpu_custom_call.1} parent=1 // pred_check
      _
    $region35: #{tpu_custom_call.1} parent=1 // pred_check_branch
      %90 = sbr.rel (0) target = $region37
    $region36: #{tpu_custom_call.1} parent=1 // pred_region
      %92 = dma.done [#allocation6], 384
    $region37: #{tpu_custom_call.1} parent=1 // pred_fallthru
      _
    // Predicated region
    $region38: #{tpu_custom_call.1} parent=1 // pred_check
      _
    $region39: #{tpu_custom_call.1} parent=1 // pred_check_branch
      %94 = sbr.rel (0) target = $region41
    $region40: #{tpu_custom_call.1} parent=1 // pred_region
      %96 = dma.done [#allocation6], 4608
    $region41: #{tpu_custom_call.1} parent=1 // pred_fallthru
      _
    // Predicated region
    $region42: #{tpu_custom_call.1} parent=1 // pred_check
      _
    $region43: #{tpu_custom_call.1} parent=1 // pred_check_branch
      %98 = sbr.rel (0) target = $region45
    $region44: #{tpu_custom_call.1} parent=1 // pred_region
      %100 = dma.done [#allocation9], 4608
    $region45: #{tpu_custom_call.1} parent=1 // pred_fallthru
      _
    // Predicated region
    $region46: #{tpu_custom_call.1} parent=1 // pred_check
      _
    $region47: #{tpu_custom_call.1} parent=1 // pred_check_branch
      %102 = sbr.rel (0) target = $region49
    $region48: #{tpu_custom_call.1} parent=1 // pred_region
      %104 = dma.done [#allocation9], 2048
    $region49: #{tpu_custom_call.1} parent=1 // pred_fallthru
      _
    %v106 = vld [vmem:[#allocation2] sm:$0xff]
    %v107 = vld [vmem:[#allocation2 + $0x8] sm:$0xf]
    %v108 = vld [vmem:[#allocation2 + $0xc] sm:$0xff]
    %v109 = vld [vmem:[#allocation2 + $0x14] sm:$0xf]
    %v110 = vld [vmem:[#allocation7] sm:$0xff]
    %v111 = vld [vmem:[#allocation7 + $0x8] sm:$0xff]
    %v112 = vld [vmem:[#allocation7 + $0x10] sm:$0xff]
    %v113 = vld [vmem:[#allocation7 + $0x18] sm:$0xff]
    %v114 = vld [vmem:[#allocation7 + $0x20] sm:$0xff]
    %v115 = vld [vmem:[#allocation7 + $0x28] sm:$0xff]
    %v116 = vld [vmem:[#allocation7 + $0x30] sm:$0xff]
    %v117 = vld [vmem:[#allocation7 + $0x38] sm:$0xff]
    %v118 = vld [vmem:[#allocation7 + $0x40] sm:$0xff]
    %v119 = vld [vmem:[#allocation7 + $0x48] sm:$0xff]
    %v120 = vld [vmem:[#allocation7 + $0x50] sm:$0xff]
    %v121 = vld [vmem:[#allocation7 + $0x58] sm:$0xff]
    %v122 = vld [vmem:[#allocation7 + $0x60] sm:$0xff]
    %v123 = vld [vmem:[#allocation7 + $0x68] sm:$0xff]
    %v124 = vld [vmem:[#allocation7 + $0x70] sm:$0xff]
    %v125 = vld [vmem:[#allocation7 + $0x78] sm:$0xff]
    %v126 = vld [vmem:[#allocation7 + $0x80] sm:$0xff]
    %v127 = vld [vmem:[#allocation7 + $0x88] sm:$0xff]
    %v128 = vld [vmem:[#allocation7 + $0x90] sm:$0xff]
    %v129 = vld [vmem:[#allocation7 + $0x98] sm:$0xff]
    %v130 = vld [vmem:[#allocation7 + $0xa0] sm:$0xff]
    %v131 = vld [vmem:[#allocation7 + $0xa8] sm:$0xff]
    %v132 = vld [vmem:[#allocation7 + $0xb0] sm:$0xff]
    %v133 = vld [vmem:[#allocation7 + $0xb8] sm:$0xff]
    %v134 = vld [vmem:[#allocation7 + $0xc0] sm:$0xff]
    %v135 = vld [vmem:[#allocation7 + $0xc8] sm:$0xff]
    %v136 = vld [vmem:[#allocation7 + $0xd0] sm:$0xff]
    %v137 = vld [vmem:[#allocation7 + $0xd8] sm:$0xff]
    %v138 = vld [vmem:[#allocation7 + $0xe0] sm:$0xff]
    %v139 = vld [vmem:[#allocation7 + $0xe8] sm:$0xff]
    %v140 = vld [vmem:[#allocation7 + $0xf0] sm:$0xff]
    %v141 = vld [vmem:[#allocation7 + $0xf8] sm:$0xff]
    %v142 = vld [vmem:[#allocation7 + $0x100] sm:$0xff]
    %v143 = vld [vmem:[#allocation7 + $0x108] sm:$0xff]
    %v144 = vld [vmem:[#allocation7 + $0x110] sm:$0xff]
    %v145 = vld [vmem:[#allocation7 + $0x118] sm:$0xff]
    %v146 = vld [vmem:[#allocation5] sm:$0xff]
    %v147 = vld [vmem:[#allocation5 + $0x8] sm:$0xf]
    %v148 = vld [vmem:[#allocation5 + $0xc] sm:$0xff]
    %v149 = vld [vmem:[#allocation5 + $0x14] sm:$0xf]
    %v150 = vld [vmem:[#allocation8] sm:$0xff]
    %v151 = vld [vmem:[#allocation8 + $0x8] sm:$0xff]
    %v152 = vld [vmem:[#allocation8 + $0x10] sm:$0xff]
    %v153 = vld [vmem:[#allocation8 + $0x18] sm:$0xff]
    %v154 = vld [vmem:[#allocation8 + $0x20] sm:$0xff]
    %v155 = vld [vmem:[#allocation8 + $0x28] sm:$0xff]
    %v156 = vld [vmem:[#allocation8 + $0x30] sm:$0xff]
    %v157 = vld [vmem:[#allocation8 + $0x38] sm:$0xff]
    %v158 = vld [vmem:[#allocation8 + $0x40] sm:$0xff]
    %v159 = vld [vmem:[#allocation8 + $0x48] sm:$0xff]
    %v160 = vld [vmem:[#allocation8 + $0x50] sm:$0xff]
    %v161 = vld [vmem:[#allocation8 + $0x58] sm:$0xff]
    %v162 = vld [vmem:[#allocation8 + $0x60] sm:$0xff]
    %v163 = vld [vmem:[#allocation8 + $0x68] sm:$0xff]
    %v164 = vld [vmem:[#allocation8 + $0x70] sm:$0xff]
    %v165 = vld [vmem:[#allocation8 + $0x78] sm:$0xff]
    %v166 = vld [vmem:[#allocation8 + $0x80] sm:$0xff]
    %v167 = vld [vmem:[#allocation8 + $0x88] sm:$0xff]
    %v168 = vld [vmem:[#allocation8 + $0x90] sm:$0xff]
    %v169 = vld [vmem:[#allocation8 + $0x98] sm:$0xff]
    %v170 = vld [vmem:[#allocation8 + $0xa0] sm:$0xff]
    %v171 = vld [vmem:[#allocation8 + $0xa8] sm:$0xff]
    %v172 = vld [vmem:[#allocation8 + $0xb0] sm:$0xff]
    %v173 = vld [vmem:[#allocation8 + $0xb8] sm:$0xff]
    %v174 = vld [vmem:[#allocation8 + $0xc0] sm:$0xff]
    %v175 = vld [vmem:[#allocation8 + $0xc8] sm:$0xff]
    %v176 = vld [vmem:[#allocation8 + $0xd0] sm:$0xff]
    %v177 = vld [vmem:[#allocation8 + $0xd8] sm:$0xff]
    %v178 = vld [vmem:[#allocation8 + $0xe0] sm:$0xff]
    %v179 = vld [vmem:[#allocation8 + $0xe8] sm:$0xff]
    %v180 = vld [vmem:[#allocation8 + $0xf0] sm:$0xff]
    %v181 = vld [vmem:[#allocation8 + $0xf8] sm:$0xff]
    %v182 = vld [vmem:[#allocation8 + $0x100] sm:$0xff]
    %v183 = vld [vmem:[#allocation8 + $0x108] sm:$0xff]
    %v184 = vld [vmem:[#allocation8 + $0x110] sm:$0xff]
    %v185 = vld [vmem:[#allocation8 + $0x118] sm:$0xff]
    %v190 = vunpack.c.l.b16 %v146
    %v191 = vunpack.c.h.b16 %v146
    %v192 = vunpack.c.l.b16 %v147
    %v193 = vunpack.c.l.b16 %v148
    %v194 = vunpack.c.h.b16 %v148
    %v195 = vunpack.c.l.b16 %v149
    %v196 = vpack.c.b16 %v193, %v190
    %v197 = vpack.c.b16 %v194, %v191
    %v198 = vpack.c.b16 %v195, %v192
    %v237 = vunpack.c.l.b16 %v150
    %v238 = vunpack.c.h.b16 %v150
    %v239 = vunpack.c.l.b16 %v151
    %v240 = vunpack.c.h.b16 %v151
    %v241 = vunpack.c.l.b16 %v152
    %v242 = vunpack.c.h.b16 %v152
    %v243 = vunpack.c.l.b16 %v153
    %v244 = vunpack.c.h.b16 %v153
    %v245 = vunpack.c.l.b16 %v154
    %v246 = vunpack.c.h.b16 %v154
    %v247 = vunpack.c.l.b16 %v155
    %v248 = vunpack.c.h.b16 %v155
    %v249 = vunpack.c.l.b16 %v156
    %v250 = vunpack.c.h.b16 %v156
    %v251 = vunpack.c.l.b16 %v157
    %v252 = vunpack.c.h.b16 %v157
    %v253 = vunpack.c.l.b16 %v158
    %v254 = vunpack.c.h.b16 %v158
    %v255 = vunpack.c.l.b16 %v159
    %v256 = vunpack.c.h.b16 %v159
    %v257 = vunpack.c.l.b16 %v160
    %v258 = vunpack.c.h.b16 %v160
    %v259 = vunpack.c.l.b16 %v161
    %v260 = vunpack.c.h.b16 %v161
    %v261 = vunpack.c.l.b16 %v162
    %v262 = vunpack.c.h.b16 %v162
    %v263 = vunpack.c.l.b16 %v163
    %v264 = vunpack.c.h.b16 %v163
    %v265 = vunpack.c.l.b16 %v164
    %v266 = vunpack.c.h.b16 %v164
    %v267 = vunpack.c.l.b16 %v165
    %v268 = vunpack.c.h.b16 %v165
    %v269 = vunpack.c.l.b16 %v166
    %v270 = vunpack.c.h.b16 %v166
    %v271 = vunpack.c.l.b16 %v167
    %v272 = vunpack.c.h.b16 %v167
    %v273 = vunpack.c.l.b16 %v168
    %v274 = vunpack.c.h.b16 %v168
    %v275 = vunpack.c.l.b16 %v169
    %v276 = vunpack.c.h.b16 %v169
    %v277 = vunpack.c.l.b16 %v170
    %v278 = vunpack.c.h.b16 %v170
    %v279 = vunpack.c.l.b16 %v171
    %v280 = vunpack.c.h.b16 %v171
    %v281 = vunpack.c.l.b16 %v172
    %v282 = vunpack.c.h.b16 %v172
    %v283 = vunpack.c.l.b16 %v173
    %v284 = vunpack.c.h.b16 %v173
    %v285 = vunpack.c.l.b16 %v174
    %v286 = vunpack.c.h.b16 %v174
    %v287 = vunpack.c.l.b16 %v175
    %v288 = vunpack.c.h.b16 %v175
    %v289 = vunpack.c.l.b16 %v176
    %v290 = vunpack.c.h.b16 %v176
    %v291 = vunpack.c.l.b16 %v177
    %v292 = vunpack.c.h.b16 %v177
    %v293 = vunpack.c.l.b16 %v178
    %v294 = vunpack.c.h.b16 %v178
    %v295 = vunpack.c.l.b16 %v179
    %v296 = vunpack.c.h.b16 %v179
    %v297 = vunpack.c.l.b16 %v180
    %v298 = vunpack.c.h.b16 %v180
    %v299 = vunpack.c.l.b16 %v181
    %v300 = vunpack.c.h.b16 %v181
    %v301 = vunpack.c.l.b16 %v182
    %v302 = vunpack.c.h.b16 %v182
    %v303 = vunpack.c.l.b16 %v183
    %v304 = vunpack.c.h.b16 %v183
    %v305 = vunpack.c.l.b16 %v184
    %v306 = vunpack.c.h.b16 %v184
    %v307 = vunpack.c.l.b16 %v185
    %v308 = vunpack.c.h.b16 %v185
    %v309 = vpack.c.b16 %v239, %v237
    %v310 = vpack.c.b16 %v240, %v238
    %v311 = vpack.c.b16 %v243, %v241
    %v312 = vpack.c.b16 %v244, %v242
    %v313 = vpack.c.b16 %v247, %v245
    %v314 = vpack.c.b16 %v248, %v246
    %v315 = vpack.c.b16 %v251, %v249
    %v316 = vpack.c.b16 %v252, %v250
    %v317 = vpack.c.b16 %v255, %v253
    %v318 = vpack.c.b16 %v256, %v254
    %v319 = vpack.c.b16 %v259, %v257
    %v320 = vpack.c.b16 %v260, %v258
    %v321 = vpack.c.b16 %v263, %v261
    %v322 = vpack.c.b16 %v264, %v262
    %v323 = vpack.c.b16 %v267, %v265
    %v324 = vpack.c.b16 %v268, %v266
    %v325 = vpack.c.b16 %v271, %v269
    %v326 = vpack.c.b16 %v272, %v270
    %v327 = vpack.c.b16 %v275, %v273
    %v328 = vpack.c.b16 %v276, %v274
    %v329 = vpack.c.b16 %v279, %v277
    %v330 = vpack.c.b16 %v280, %v278
    %v331 = vpack.c.b16 %v283, %v281
    %v332 = vpack.c.b16 %v284, %v282
    %v333 = vpack.c.b16 %v287, %v285
    %v334 = vpack.c.b16 %v288, %v286
    %v335 = vpack.c.b16 %v291, %v289
    %v336 = vpack.c.b16 %v292, %v290
    %v337 = vpack.c.b16 %v295, %v293
    %v338 = vpack.c.b16 %v296, %v294
    %v339 = vpack.c.b16 %v299, %v297
    %v340 = vpack.c.b16 %v300, %v298
    %v341 = vpack.c.b16 %v303, %v301
    %v342 = vpack.c.b16 %v304, %v302
    %v343 = vpack.c.b16 %v307, %v305
    %v344 = vpack.c.b16 %v308, %v306
    %vm381 = vcmask 261120
    %v383 = vsel %vm381, %v198, 0
    %385 = vmatpush.bf16.msra.mxu0 %v323
    %386 = vmatpush.bf16.msra.mxu0 %v321
    %387 = vmatpush.bf16.msra.mxu0 %v319
    %388 = vmatpush.bf16.msra.mxu0 %v317
    %389 = vmatpush.bf16.msra.mxu0 %v315
    %390 = vmatpush.bf16.msra.mxu0 %v313
    %391 = vmatpush.bf16.msra.mxu0 %v311
    %392 = vmatpush.bf16.msra.mxu0 %v309
    %393 = vmatmul.bf16.gmra.mxu0 %v196
    %v394 = vpop.f32.mrf.mxu0
    %v395 = vadd.f32 0.0, %v394
    %v396 = vpop.f32.mrf.mxu0
    %v397 = vadd.f32 0.0, %v396
    %398 = vdwg.mxu0
    %399 = vmatpush.bf16.msra.mxu0 %v339
    %400 = vmatpush.bf16.msra.mxu0 %v337
    %401 = vmatpush.bf16.msra.mxu0 %v335
    %402 = vmatpush.bf16.msra.mxu0 %v333
    %403 = vmatpush.bf16.msra.mxu0 %v331
    %404 = vmatpush.bf16.msra.mxu0 %v329
    %405 = vmatpush.bf16.msra.mxu0 %v327
    %406 = vmatpush.bf16.msra.mxu0 %v325
    %407 = vmatmul.bf16.gmra.mxu0 %v197
    %v408 = vpop.f32.mrf.mxu0
    %v409 = vadd.f32 %v395, %v408
    %v410 = vpop.f32.mrf.mxu0
    %v411 = vadd.f32 %v397, %v410
    %412 = vdwg.mxu0
    %413 = vmatpush.bf16.msra.mxu0 0
    %414 = vmatpush.bf16.msra.mxu0 0
    %415 = vmatpush.bf16.msra.mxu0 0
    %416 = vmatpush.bf16.msra.mxu0 0
    %417 = vmatpush.bf16.msra.mxu0 0
    %418 = vmatpush.bf16.msra.mxu0 0
    %419 = vmatpush.bf16.msra.mxu0 %v343
    %420 = vmatpush.bf16.msra.mxu0 %v341
    %421 = vmatmul.bf16.gmra.mxu0 %v383
    %v422 = vpop.f32.mrf.mxu0
    %v423 = vadd.f32 %v409, %v422
    %v424 = vpop.f32.mrf.mxu0
    %v425 = vadd.f32 %v411, %v424
    %426 = vdwg.mxu0
    %427 = vmatpush.bf16.msra.mxu0 %v324
    %428 = vmatpush.bf16.msra.mxu0 %v322
    %429 = vmatpush.bf16.msra.mxu0 %v320
    %430 = vmatpush.bf16.msra.mxu0 %v318
    %431 = vmatpush.bf16.msra.mxu0 %v316
    %432 = vmatpush.bf16.msra.mxu0 %v314
    %433 = vmatpush.bf16.msra.mxu0 %v312
    %434 = vmatpush.bf16.msra.mxu0 %v310
    %435 = vmatmul.bf16.gmra.mxu0 %v196
    %v436 = vpop.f32.mrf.mxu0
    %v437 = vadd.f32 0.0, %v436
    %v438 = vpop.f32.mrf.mxu0
    %v439 = vadd.f32 0.0, %v438
    %440 = vdwg.mxu0
    %441 = vmatpush.bf16.msra.mxu0 %v340
    %442 = vmatpush.bf16.msra.mxu0 %v338
    %443 = vmatpush.bf16.msra.mxu0 %v336
    %444 = vmatpush.bf16.msra.mxu0 %v334
    %445 = vmatpush.bf16.msra.mxu0 %v332
    %446 = vmatpush.bf16.msra.mxu0 %v330
    %447 = vmatpush.bf16.msra.mxu0 %v328
    %448 = vmatpush.bf16.msra.mxu0 %v326
    %449 = vmatmul.bf16.gmra.mxu0 %v197
    %v450 = vpop.f32.mrf.mxu0
    %v451 = vadd.f32 %v437, %v450
    %v452 = vpop.f32.mrf.mxu0
    %v453 = vadd.f32 %v439, %v452
    %454 = vdwg.mxu0
    %455 = vmatpush.bf16.msra.mxu0 0
    %456 = vmatpush.bf16.msra.mxu0 0
    %457 = vmatpush.bf16.msra.mxu0 0
    %458 = vmatpush.bf16.msra.mxu0 0
    %459 = vmatpush.bf16.msra.mxu0 0
    %460 = vmatpush.bf16.msra.mxu0 0
    %461 = vmatpush.bf16.msra.mxu0 %v344
    %462 = vmatpush.bf16.msra.mxu0 %v342
    %463 = vmatmul.bf16.gmra.mxu0 %v383
    %v464 = vpop.f32.mrf.mxu0
    %v465 = vadd.f32 %v451, %v464
    %v466 = vpop.f32.mrf.mxu0
    %v467 = vadd.f32 %v453, %v466
    %468 = vdwg.mxu0
    %v473 = vunpack.c.l.b16 %v106
    %v474 = vunpack.c.h.b16 %v106
    %v475 = vunpack.c.l.b16 %v107
    %v476 = vunpack.c.l.b16 %v108
    %v477 = vunpack.c.h.b16 %v108
    %v478 = vunpack.c.l.b16 %v109
    %v479 = vpack.c.b16 %v476, %v473
    %v480 = vpack.c.b16 %v477, %v474
    %v481 = vpack.c.b16 %v478, %v475
    %v520 = vunpack.c.l.b16 %v110
    %v521 = vunpack.c.h.b16 %v110
    %v522 = vunpack.c.l.b16 %v111
    %v523 = vunpack.c.h.b16 %v111
    %v524 = vunpack.c.l.b16 %v112
    %v525 = vunpack.c.h.b16 %v112
    %v526 = vunpack.c.l.b16 %v113
    %v527 = vunpack.c.h.b16 %v113
    %v528 = vunpack.c.l.b16 %v114
    %v529 = vunpack.c.h.b16 %v114
    %v530 = vunpack.c.l.b16 %v115
    %v531 = vunpack.c.h.b16 %v115
    %v532 = vunpack.c.l.b16 %v116
    %v533 = vunpack.c.h.b16 %v116
    %v534 = vunpack.c.l.b16 %v117
    %v535 = vunpack.c.h.b16 %v117
    %v536 = vunpack.c.l.b16 %v118
    %v537 = vunpack.c.h.b16 %v118
    %v538 = vunpack.c.l.b16 %v119
    %v539 = vunpack.c.h.b16 %v119
    %v540 = vunpack.c.l.b16 %v120
    %v541 = vunpack.c.h.b16 %v120
    %v542 = vunpack.c.l.b16 %v121
    %v543 = vunpack.c.h.b16 %v121
    %v544 = vunpack.c.l.b16 %v122
    %v545 = vunpack.c.h.b16 %v122
    %v546 = vunpack.c.l.b16 %v123
    %v547 = vunpack.c.h.b16 %v123
    %v548 = vunpack.c.l.b16 %v124
    %v549 = vunpack.c.h.b16 %v124
    %v550 = vunpack.c.l.b16 %v125
    %v551 = vunpack.c.h.b16 %v125
    %v552 = vunpack.c.l.b16 %v126
    %v553 = vunpack.c.h.b16 %v126
    %v554 = vunpack.c.l.b16 %v127
    %v555 = vunpack.c.h.b16 %v127
    %v556 = vunpack.c.l.b16 %v128
    %v557 = vunpack.c.h.b16 %v128
    %v558 = vunpack.c.l.b16 %v129
    %v559 = vunpack.c.h.b16 %v129
    %v560 = vunpack.c.l.b16 %v130
    %v561 = vunpack.c.h.b16 %v130
    %v562 = vunpack.c.l.b16 %v131
    %v563 = vunpack.c.h.b16 %v131
    %v564 = vunpack.c.l.b16 %v132
    %v565 = vunpack.c.h.b16 %v132
    %v566 = vunpack.c.l.b16 %v133
    %v567 = vunpack.c.h.b16 %v133
    %v568 = vunpack.c.l.b16 %v134
    %v569 = vunpack.c.h.b16 %v134
    %v570 = vunpack.c.l.b16 %v135
    %v571 = vunpack.c.h.b16 %v135
    %v572 = vunpack.c.l.b16 %v136
    %v573 = vunpack.c.h.b16 %v136
    %v574 = vunpack.c.l.b16 %v137
    %v575 = vunpack.c.h.b16 %v137
    %v576 = vunpack.c.l.b16 %v138
    %v577 = vunpack.c.h.b16 %v138
    %v578 = vunpack.c.l.b16 %v139
    %v579 = vunpack.c.h.b16 %v139
    %v580 = vunpack.c.l.b16 %v140
    %v581 = vunpack.c.h.b16 %v140
    %v582 = vunpack.c.l.b16 %v141
    %v583 = vunpack.c.h.b16 %v141
    %v584 = vunpack.c.l.b16 %v142
    %v585 = vunpack.c.h.b16 %v142
    %v586 = vunpack.c.l.b16 %v143
    %v587 = vunpack.c.h.b16 %v143
    %v588 = vunpack.c.l.b16 %v144
    %v589 = vunpack.c.h.b16 %v144
    %v590 = vunpack.c.l.b16 %v145
    %v591 = vunpack.c.h.b16 %v145
    %v592 = vpack.c.b16 %v522, %v520
    %v593 = vpack.c.b16 %v523, %v521
    %v594 = vpack.c.b16 %v526, %v524
    %v595 = vpack.c.b16 %v527, %v525
    %v596 = vpack.c.b16 %v530, %v528
    %v597 = vpack.c.b16 %v531, %v529
    %v598 = vpack.c.b16 %v534, %v532
    %v599 = vpack.c.b16 %v535, %v533
    %v600 = vpack.c.b16 %v538, %v536
    %v601 = vpack.c.b16 %v539, %v537
    %v602 = vpack.c.b16 %v542, %v540
    %v603 = vpack.c.b16 %v543, %v541
    %v604 = vpack.c.b16 %v546, %v544
    %v605 = vpack.c.b16 %v547, %v545
    %v606 = vpack.c.b16 %v550, %v548
    %v607 = vpack.c.b16 %v551, %v549
    %v608 = vpack.c.b16 %v554, %v552
    %v609 = vpack.c.b16 %v555, %v553
    %v610 = vpack.c.b16 %v558, %v556
    %v611 = vpack.c.b16 %v559, %v557
    %v612 = vpack.c.b16 %v562, %v560
    %v613 = vpack.c.b16 %v563, %v561
    %v614 = vpack.c.b16 %v566, %v564
    %v615 = vpack.c.b16 %v567, %v565
    %v616 = vpack.c.b16 %v570, %v568
    %v617 = vpack.c.b16 %v571, %v569
    %v618 = vpack.c.b16 %v574, %v572
    %v619 = vpack.c.b16 %v575, %v573
    %v620 = vpack.c.b16 %v578, %v576
    %v621 = vpack.c.b16 %v579, %v577
    %v622 = vpack.c.b16 %v582, %v580
    %v623 = vpack.c.b16 %v583, %v581
    %v624 = vpack.c.b16 %v586, %v584
    %v625 = vpack.c.b16 %v587, %v585
    %v626 = vpack.c.b16 %v590, %v588
    %v627 = vpack.c.b16 %v591, %v589
    %v665 = vsel %vm381, %v481, 0
    %667 = vmatpush.bf16.msra.mxu0 %v606
    %668 = vmatpush.bf16.msra.mxu0 %v604
    %669 = vmatpush.bf16.msra.mxu0 %v602
    %670 = vmatpush.bf16.msra.mxu0 %v600
    %671 = vmatpush.bf16.msra.mxu0 %v598
    %672 = vmatpush.bf16.msra.mxu0 %v596
    %673 = vmatpush.bf16.msra.mxu0 %v594
    %674 = vmatpush.bf16.msra.mxu0 %v592
    %675 = vmatmul.bf16.gmra.mxu0 %v479
    %v676 = vpop.f32.mrf.mxu0
    %v677 = vadd.f32 %v423, %v676
    %v678 = vpop.f32.mrf.mxu0
    %v679 = vadd.f32 %v425, %v678
    %680 = vdwg.mxu0
    %681 = vmatpush.bf16.msra.mxu0 %v622
    %682 = vmatpush.bf16.msra.mxu0 %v620
    %683 = vmatpush.bf16.msra.mxu0 %v618
    %684 = vmatpush.bf16.msra.mxu0 %v616
    %685 = vmatpush.bf16.msra.mxu0 %v614
    %686 = vmatpush.bf16.msra.mxu0 %v612
    %687 = vmatpush.bf16.msra.mxu0 %v610
    %688 = vmatpush.bf16.msra.mxu0 %v608
    %689 = vmatmul.bf16.gmra.mxu0 %v480
    %v690 = vpop.f32.mrf.mxu0
    %v691 = vadd.f32 %v677, %v690
    %v692 = vpop.f32.mrf.mxu0
    %v693 = vadd.f32 %v679, %v692
    %694 = vdwg.mxu0
    %695 = vmatpush.bf16.msra.mxu0 0
    %696 = vmatpush.bf16.msra.mxu0 0
    %697 = vmatpush.bf16.msra.mxu0 0
    %698 = vmatpush.bf16.msra.mxu0 0
    %699 = vmatpush.bf16.msra.mxu0 0
    %700 = vmatpush.bf16.msra.mxu0 0
    %701 = vmatpush.bf16.msra.mxu0 %v626
    %702 = vmatpush.bf16.msra.mxu0 %v624
    %703 = vmatmul.bf16.gmra.mxu0 %v665
    %v704 = vpop.f32.mrf.mxu0
    %v705 = vadd.f32 %v691, %v704
    %v706 = vpop.f32.mrf.mxu0
    %v707 = vadd.f32 %v693, %v706
    %708 = vdwg.mxu0
    %709 = vmatpush.bf16.msra.mxu0 %v607
    %710 = vmatpush.bf16.msra.mxu0 %v605
    %711 = vmatpush.bf16.msra.mxu0 %v603
    %712 = vmatpush.bf16.msra.mxu0 %v601
    %713 = vmatpush.bf16.msra.mxu0 %v599
    %714 = vmatpush.bf16.msra.mxu0 %v597
    %715 = vmatpush.bf16.msra.mxu0 %v595
    %716 = vmatpush.bf16.msra.mxu0 %v593
    %717 = vmatmul.bf16.gmra.mxu0 %v479
    %v718 = vpop.f32.mrf.mxu0
    %v719 = vadd.f32 %v465, %v718
    %v720 = vpop.f32.mrf.mxu0
    %v721 = vadd.f32 %v467, %v720
    %722 = vdwg.mxu0
    %723 = vmatpush.bf16.msra.mxu0 %v623
    %724 = vmatpush.bf16.msra.mxu0 %v621
    %725 = vmatpush.bf16.msra.mxu0 %v619
    %726 = vmatpush.bf16.msra.mxu0 %v617
    %727 = vmatpush.bf16.msra.mxu0 %v615
    %728 = vmatpush.bf16.msra.mxu0 %v613
    %729 = vmatpush.bf16.msra.mxu0 %v611
    %730 = vmatpush.bf16.msra.mxu0 %v609
    %731 = vmatmul.bf16.gmra.mxu0 %v480
    %v732 = vpop.f32.mrf.mxu0
    %v733 = vadd.f32 %v719, %v732
    %v734 = vpop.f32.mrf.mxu0
    %v735 = vadd.f32 %v721, %v734
    %736 = vdwg.mxu0
    %737 = vmatpush.bf16.msra.mxu0 0
    %738 = vmatpush.bf16.msra.mxu0 0
    %739 = vmatpush.bf16.msra.mxu0 0
    %740 = vmatpush.bf16.msra.mxu0 0
    %741 = vmatpush.bf16.msra.mxu0 0
    %742 = vmatpush.bf16.msra.mxu0 0
    %743 = vmatpush.bf16.msra.mxu0 %v627
    %744 = vmatpush.bf16.msra.mxu0 %v625
    %745 = vmatmul.bf16.gmra.mxu0 %v665
    %v746 = vpop.f32.mrf.mxu0
    %v747 = vadd.f32 %v733, %v746
    %v748 = vpop.f32.mrf.mxu0
    %v749 = vadd.f32 %v735, %v748
    %750 = vdwg.mxu0
    %v751 = vld [vmem:[%s4] sm:$0x3]
    %v753 = vperm.slane %v751, 0
    %v754 = vperm.slane %v751, 1
    %v757 = vadd.f32 %v705, %v753
    %v758 = vadd.f32 %v747, %v754
    %v759 = vadd.f32 %v707, %v753
    %v760 = vadd.f32 %v749, %v754
    %v761 = vmax.f32 %v757, 0.0
    %v762 = vmax.f32 %v758, 0.0
    %v763 = vmax.f32 %v759, 0.0
    %v764 = vmax.f32 %v760, 0.0
    %v765 = vpack.c.bf16 %v763, %v761
    %v766 = vpack.c.bf16 %v764, %v762
    %v767 = vld [vmem:[#allocation10] sm:$0xf]
    %v768 = vld [vmem:[#allocation10 + $0x4] sm:$0xf]
    %v769 = vld [vmem:[#allocation10 + $0x8] sm:$0xf]
    %v770 = vld [vmem:[#allocation10 + $0xc] sm:$0xf]
    %v771 = vld [vmem:[#allocation10 + $0x10] sm:$0xf]
    %v772 = vld [vmem:[#allocation10 + $0x14] sm:$0xf]
    %v773 = vld [vmem:[#allocation10 + $0x18] sm:$0xf]
    %v774 = vld [vmem:[#allocation10 + $0x1c] sm:$0xf]
    %v775 = vld [vmem:[#allocation10 + $0x20] sm:$0xf]
    %v776 = vld [vmem:[#allocation10 + $0x24] sm:$0xf]
    %v777 = vld [vmem:[#allocation10 + $0x28] sm:$0xf]
    %v778 = vld [vmem:[#allocation10 + $0x2c] sm:$0xf]
    %v779 = vld [vmem:[#allocation10 + $0x30] sm:$0xf]
    %v780 = vld [vmem:[#allocation10 + $0x34] sm:$0xf]
    %v781 = vld [vmem:[#allocation10 + $0x38] sm:$0xf]
    %v782 = vld [vmem:[#allocation10 + $0x3c] sm:$0xf]
    %v783 = vld [vmem:[#allocation10 + $0x40] sm:$0xf]
    %v784 = vld [vmem:[#allocation10 + $0x44] sm:$0xf]
    %v785 = vld [vmem:[#allocation10 + $0x48] sm:$0xf]
    %v786 = vld [vmem:[#allocation10 + $0x4c] sm:$0xf]
    %v787 = vld [vmem:[#allocation10 + $0x50] sm:$0xf]
    %v788 = vld [vmem:[#allocation10 + $0x54] sm:$0xf]
    %v789 = vld [vmem:[#allocation10 + $0x58] sm:$0xf]
    %v790 = vld [vmem:[#allocation10 + $0x5c] sm:$0xf]
    %v791 = vld [vmem:[#allocation10 + $0x60] sm:$0xf]
    %v792 = vld [vmem:[#allocation10 + $0x64] sm:$0xf]
    %v793 = vld [vmem:[#allocation10 + $0x68] sm:$0xf]
    %v794 = vld [vmem:[#allocation10 + $0x6c] sm:$0xf]
    %v795 = vld [vmem:[#allocation10 + $0x70] sm:$0xf]
    %v796 = vld [vmem:[#allocation10 + $0x74] sm:$0xf]
    %v797 = vld [vmem:[#allocation10 + $0x78] sm:$0xf]
    %v798 = vld [vmem:[#allocation10 + $0x7c] sm:$0xf]
    %v799 = vld [vmem:[%s6] sm:$0x1]
    %v801 = vperm.slane %v799, 0
    %v835 = vunpack.c.l.b16 %v767
    %v836 = vunpack.c.l.b16 %v768
    %v837 = vunpack.c.l.b16 %v769
    %v838 = vunpack.c.l.b16 %v770
    %v839 = vunpack.c.l.b16 %v771
    %v840 = vunpack.c.l.b16 %v772
    %v841 = vunpack.c.l.b16 %v773
    %v842 = vunpack.c.l.b16 %v774
    %v843 = vunpack.c.l.b16 %v775
    %v844 = vunpack.c.l.b16 %v776
    %v845 = vunpack.c.l.b16 %v777
    %v846 = vunpack.c.l.b16 %v778
    %v847 = vunpack.c.l.b16 %v779
    %v848 = vunpack.c.l.b16 %v780
    %v849 = vunpack.c.l.b16 %v781
    %v850 = vunpack.c.l.b16 %v782
    %v851 = vunpack.c.l.b16 %v783
    %v852 = vunpack.c.l.b16 %v784
    %v853 = vunpack.c.l.b16 %v785
    %v854 = vunpack.c.l.b16 %v786
    %v855 = vunpack.c.l.b16 %v787
    %v856 = vunpack.c.l.b16 %v788
    %v857 = vunpack.c.l.b16 %v789
    %v858 = vunpack.c.l.b16 %v790
    %v859 = vunpack.c.l.b16 %v791
    %v860 = vunpack.c.l.b16 %v792
    %v861 = vunpack.c.l.b16 %v793
    %v862 = vunpack.c.l.b16 %v794
    %v863 = vunpack.c.l.b16 %v795
    %v864 = vunpack.c.l.b16 %v796
    %v865 = vunpack.c.l.b16 %v797
    %v866 = vunpack.c.l.b16 %v798
    %v867 = vpack.c.b16 %v836, %v835
    %v868 = vpack.c.b16 %v838, %v837
    %v869 = vpack.c.b16 %v840, %v839
    %v870 = vpack.c.b16 %v842, %v841
    %v871 = vpack.c.b16 %v844, %v843
    %v872 = vpack.c.b16 %v846, %v845
    %v873 = vpack.c.b16 %v848, %v847
    %v874 = vpack.c.b16 %v850, %v849
    %v875 = vpack.c.b16 %v852, %v851
    %v876 = vpack.c.b16 %v854, %v853
    %v877 = vpack.c.b16 %v856, %v855
    %v878 = vpack.c.b16 %v858, %v857
    %v879 = vpack.c.b16 %v860, %v859
    %v880 = vpack.c.b16 %v862, %v861
    %v881 = vpack.c.b16 %v864, %v863
    %v882 = vpack.c.b16 %v866, %v865
    %899 = vmatpush.bf16.msra.mxu0 %v874
    %900 = vmatpush.bf16.msra.mxu0 %v873
    %901 = vmatpush.bf16.msra.mxu0 %v872
    %902 = vmatpush.bf16.msra.mxu0 %v871
    %903 = vmatpush.bf16.msra.mxu0 %v870
    %904 = vmatpush.bf16.msra.mxu0 %v869
    %905 = vmatpush.bf16.msra.mxu0 %v868
    %906 = vmatpush.bf16.msra.mxu0 %v867
    %907 = vmatmul.bf16.gmra.mxu0 %v765
    %v908 = vpop.f32.mrf.mxu0
    %v909 = vadd.f32 %v801, %v908
    %v910 = vpop.f32.mrf.mxu0
    %v911 = vadd.f32 %v801, %v910
    %912 = vdwg.mxu0
    %913 = vmatpush.bf16.msra.mxu0 %v882
    %914 = vmatpush.bf16.msra.mxu0 %v881
    %915 = vmatpush.bf16.msra.mxu0 %v880
    %916 = vmatpush.bf16.msra.mxu0 %v879
    %917 = vmatpush.bf16.msra.mxu0 %v878
    %918 = vmatpush.bf16.msra.mxu0 %v877
    %919 = vmatpush.bf16.msra.mxu0 %v876
    %920 = vmatpush.bf16.msra.mxu0 %v875
    %921 = vmatmul.bf16.gmra.mxu0 %v766
    %v922 = vpop.f32.mrf.mxu0
    %v923 = vadd.f32 %v909, %v922
    %v924 = vpop.f32.mrf.mxu0
    %v925 = vadd.f32 %v911, %v924
    %926 = vdwg.mxu0
    %927 = vst [vmem:[#allocation11] sm:$0xff] %v923
    %928 = vst [vmem:[#allocation11 + $0x8] sm:$0xff] %v925
    // Predicated region
    $region50: #{tpu_custom_call.1} parent=1 // pred_check
      _
    $region51: #{tpu_custom_call.1} parent=1 // pred_check_branch
      %930 = sbr.rel (0) target = $region53
    $region52: #{tpu_custom_call.1} parent=1 // pred_region
      %932 = vsyncadd [#allocation4], 0
      %s933 = sshll.u32 [#allocation11], 4
      %s934 = int_to_ptr.vmem [resolvable:$true] %s933
      %s935 = sshll.u32 %s7, 4
      %s936 = int_to_ptr.hbm [resolvable:$true] %s935
      %941 = dma.vmem_to_hbm [thread:$0]  %s934, 256, %s936, [#allocation4], 128, 128, 8
    $region53: #{tpu_custom_call.1} parent=1 // pred_fallthru
      _
    // Predicated region
    $region54: #{tpu_custom_call.1} parent=1 // pred_check
      _
    $region55: #{tpu_custom_call.1} parent=1 // pred_check_branch
      %943 = sbr.rel (0) target = $region57
    $region56: #{tpu_custom_call.1} parent=1 // pred_region
      %945 = dma.done [#allocation4], 256
    $region57: #{tpu_custom_call.1} parent=1 // pred_fallthru
      _
    %946 = vsyncpa [#allocation3], 1
    %947 = vsyncpa [#allocation6], 1
    %948 = vsyncpa [#allocation9], 1
    %949 = vsyncpa [#allocation4], 1

</llo_original>
